<compile_context>
chip_gen: v7x
topology: tpu7x:2x2x1
jax: 0.10.0
libtpu: 0.0.40
codegen_flags: <defaults>
</compile_context>

<pallas_src>
import jax
import jax.numpy as jnp
import numpy as np
from jax.experimental import pallas as pl
from jax.experimental.pallas import tpu as pltpu


# Kept only for the reference check in __main__; the kernel hard-codes the
# copy/negate pattern instead of streaming this 108-byte constant through DMA.
MAPPING_MATRIX = np.array(
    [
        [[0.0, 0.0, 0.0], [0.0, 0.0, -1.0], [0.0, 1.0, 0.0]],
        [[0.0, 0.0, 1.0], [0.0, 0.0, 0.0], [-1.0, 0.0, 0.0]],
        [[0.0, -1.0, 0.0], [1.0, 0.0, 0.0], [0.0, 0.0, 0.0]],
    ],
    dtype=np.float32,
)  # (3, 3, 3)

LANE = 128
MAX_TILE = 64 * 1024        # lanes per grid step (~12 MiB double-buffered VMEM)
MIN_STEP_LANES = 4 * 1024   # never shrink tiles below this just to add steps
TARGET_MIN_STEPS = 4        # prefer >=4 grid steps on big batches (overlap / 2 TCs)
VMEM_LIMIT_BYTES = 32 * 1024 * 1024  # covers 12 MiB of block buffers on all gens


def _round_up(n: int, m: int) -> int:
    return ((n + m - 1) // m) * m


def _choose_tiling(batch: int):
    """Pick (tile_lanes, padded_batch) with tile_lanes * n_steps == padded_batch.

    Pads only to a multiple of 128 lanes (plus <128 lanes per step so the tile
    divides the padded batch) instead of padding to a full MAX_TILE.
    """
    bp = _round_up(batch, LANE)
    n_steps = pl.cdiv(bp, MAX_TILE)
    # Keep a few steps for DMA overlap / multi-core sharding, but only when the
    # batch is large enough that each step still moves >= MIN_STEP_LANES lanes.
    n_steps = max(n_steps, min(TARGET_MIN_STEPS, max(bp // MIN_STEP_LANES, 1)))
    tile = _round_up(pl.cdiv(bp, n_steps), LANE)
    n_steps = pl.cdiv(bp, tile)
    return tile, n_steps * tile


def skew_kernel(xt_ref, o_ref):
    # xt_ref: (3, T) VMEM block -> rows are x, y, z across T batch lanes.
    # o_ref : (9, T) VMEM block -> row r corresponds to (i, j) = (r // 3, r % 3).
    x = xt_ref[0:1, :]     # (1, T)
    y = xt_ref[1:2, :]
    z = xt_ref[2:3, :]
    zero = jnp.zeros_like(x)
    o_ref[...] = jnp.concatenate(
        [zero, -z,   y,      # row 0 of each 3x3 matrix
         z,    zero, -x,     # row 1
         -y,   x,    zero],  # row 2
        axis=0,
    )


def skew_pallas(X: jax.Array, *, lane_dense_output: bool = False) -> jax.Array:
    """X: (B, 3) -> skew-symmetric matrices.

    Returns (B, 3, 3) by default (module contract). With
    `lane_dense_output=True` returns the transpose-free (3, 3, B) layout,
    which avoids one full read+write of the 9*B-word output in HBM.
    """
    B = X.shape[0]
    if B == 0:  # guard: empty batch (avoids grid=(0,) / div-by-zero)
        if lane_dense_output:
            return jnp.zeros((3, 3, 0), jnp.float32)
        return jnp.zeros((0, 3, 3), jnp.float32)

    T, Bp = _choose_tiling(B)

    # Input layout plumbing: batch on the lane axis, padded to n_steps * T.
    # (astype / pad are no-ops when X is already f32 and B is tile-aligned.)
    Xt = X.astype(jnp.float32).T                  # (3, B)
    if Bp != B:
        Xt = jnp.pad(Xt, ((0, 0), (0, Bp - B)))

    out = pl.pallas_call(
        skew_kernel,
        out_shape=jax.ShapeDtypeStruct((9, Bp), jnp.float32),
        grid=(Bp // T,),
        in_specs=[pl.BlockSpec((3, T), lambda i: (0, i))],
        out_specs=pl.BlockSpec((9, T), lambda i: (0, i)),
        compiler_params=pltpu.CompilerParams(
            dimension_semantics=("parallel",),
            vmem_limit_bytes=VMEM_LIMIT_BYTES,
        ),
        cost_estimate=pl.CostEstimate(
            flops=0, transcendentals=0, bytes_accessed=(3 + 9) * Bp * 4),
    )(Xt)                                          # (9, Bp)

    if lane_dense_output:
        # Free view: (9, Bp) -> (3, 3, Bp); slice off lane padding.
        return out.reshape(3, 3, Bp)[:, :, :B]

    # Module contract is (B, 3, 3): one XLA transpose of the lane-dense result.
    # Consumers that can take (3, 3, B) should use lane_dense_output=True.
    return out[:, :B].T.reshape(B, 3, 3)


def skew_jnp(X: jax.Array) -> jax.Array:
    """Plain-XLA fallback (cheaper for small batches: no custom-call/DMA overhead)."""
    X = X.astype(jnp.float32)
    x, y, z = X[:, 0], X[:, 1], X[:, 2]
    zero = jnp.zeros_like(x)
    return jnp.stack(
        [zero, -z, y, z, zero, -x, -y, x, zero], axis=-1
    ).reshape(X.shape[0], 3, 3)


def skew(X: jax.Array, small_batch_threshold: int = 16 * 1024) -> jax.Array:
    """Forward pass of the Skew module: (B, 3) -> (B, 3, 3).

    Batches smaller than `small_batch_threshold` use the fused-XLA path
    (the Pallas custom call only pays off once B spans multiple lane tiles).
    """
    if X.shape[0] < small_batch_threshold:
        return skew_jnp(X)
    return skew_pallas(X)


if __name__ == "__main__":
    key = jax.random.PRNGKey(0)
    M = jnp.asarray(MAPPING_MATRIX)

    # Exercise the Pallas kernel directly at small shapes (aligned + padded).
    for B in (8, 300):
        X = jax.random.normal(jax.random.fold_in(key, B), (B, 3), dtype=jnp.float32)
        A_ref = (M[None, :, :, :] * X[:, None, None, :]).sum(axis=-1)

        A = jax.block_until_ready(skew_pallas(X))
        assert A.shape == (B, 3, 3), A.shape
        np.testing.assert_allclose(np.asarray(A), np.asarray(A_ref),
                                   rtol=1e-6, atol=1e-6)

        A_ld = jax.block_until_ready(skew_pallas(X, lane_dense_output=True))
        np.testing.assert_allclose(
            np.asarray(A_ld), np.asarray(jnp.transpose(A_ref, (1, 2, 0))),
            rtol=1e-6, atol=1e-6)

    # Dispatcher sanity (small batch -> fused-XLA path) and empty-batch guard.
    Xs = jax.random.normal(key, (8, 3), dtype=jnp.float32)
    A_small = jax.block_until_ready(skew(Xs))
    A_small_ref = (M[None, :, :, :] * Xs[:, None, None, :]).sum(axis=-1)
    np.testing.assert_allclose(np.asarray(A_small), np.asarray(A_small_ref),
                               rtol=1e-6, atol=1e-6)
    assert skew_pallas(jnp.zeros((0, 3), jnp.float32)).shape == (0, 3, 3)

    print("KERNEL_OK")
</pallas_src>

<mosaic_0001>
module attributes {stable_mosaic.version = 11 : i64} {
  func.func @skew_kernel(%arg0: i32, %arg1: memref<3x128xf32, #tpu.memory_space<vmem>>, %arg2: memref<9x128xf32, #tpu.memory_space<vmem>>) attributes {dimension_semantics = [#tpu.dimension_semantics<parallel>], iteration_bounds = array<i64: 1>, scalar_prefetch = 0 : i64, scratch_operands = 0 : i64, tpu.core_type = #tpu.core_type<tc>, window_params = [{transform_indices = @transform_0, window_bounds = array<i64: 3, 128>}, {transform_indices = @transform_1, window_bounds = array<i64: 9, 128>}]} {
    %c0 = arith.constant 0 : index
    %c0_0 = arith.constant 0 : index
    %0 = vector.load %arg1[%c0, %c0_0] : memref<3x128xf32, #tpu.memory_space<vmem>>, vector<1x128xf32>
    %c1 = arith.constant 1 : index
    %c0_1 = arith.constant 0 : index
    %1 = vector.load %arg1[%c1, %c0_1] : memref<3x128xf32, #tpu.memory_space<vmem>>, vector<1x128xf32>
    %c2 = arith.constant 2 : index
    %c0_2 = arith.constant 0 : index
    %2 = vector.load %arg1[%c2, %c0_2] : memref<3x128xf32, #tpu.memory_space<vmem>>, vector<1x128xf32>
    %cst = arith.constant 0.000000e+00 : f32
    %3 = vector.broadcast %cst : f32 to vector<1x128xf32>
    %cst_3 = arith.constant 0.000000e+00 : f32
    %4 = vector.broadcast %cst_3 : f32 to vector<1x128xf32>
    %5 = arith.subf %4, %2 : vector<1x128xf32>
    %cst_4 = arith.constant 0.000000e+00 : f32
    %6 = vector.broadcast %cst_4 : f32 to vector<1x128xf32>
    %7 = arith.subf %6, %0 : vector<1x128xf32>
    %cst_5 = arith.constant 0.000000e+00 : f32
    %8 = vector.broadcast %cst_5 : f32 to vector<1x128xf32>
    %9 = arith.subf %8, %1 : vector<1x128xf32>
    %10 = tpu.concatenate %3, %5, %1, %2, %3, %7, %9, %0, %3 in 0 : vector<1x128xf32>, vector<1x128xf32>, vector<1x128xf32>, vector<1x128xf32>, vector<1x128xf32>, vector<1x128xf32>, vector<1x128xf32>, vector<1x128xf32>, vector<1x128xf32> -> vector<9x128xf32>
    %c0_6 = arith.constant 0 : index
    %c0_7 = arith.constant 0 : index
    %11 = vector.load %arg2[%c0_6, %c0_7] : memref<9x128xf32, #tpu.memory_space<vmem>>, vector<9x128xf32>
    tpu.vector_store %arg2[%c0_6, %c0_7], %10 {strides = array<i32>} : memref<9x128xf32, #tpu.memory_space<vmem>>, vector<9x128xf32>,
    return
  }
  func.func @transform_0(%arg0: i32) -> (i32, i32) {
    %c0_i32 = arith.constant 0 : i32
    %c0_i32_0 = arith.constant 0 : i32
    return %c0_i32, %arg0 : i32, i32
  }
  func.func @transform_1(%arg0: i32) -> (i32, i32) {
    %c0_i32 = arith.constant 0 : i32
    %c0_i32_0 = arith.constant 0 : i32
    return %c0_i32, %arg0 : i32, i32
  }
}

</mosaic_0001>

<llo_original>
// kernel: tpu_custom_call.1
$region0: #{tpu_custom_call.1}
  #allocation0 [shape = 'u32[]', space=smem, size = 0x4, offset = 0x4, fixed_abs, tag = 'smem constant byte address 0x4 - core index']
  #allocation1 [shape = 'u32[144,128]{1,0:T(1,128)}', space=vmem, size = 0x12000, scoped, tag = 'internal scratch']
  %s0 = inlined_call_operand.hbm [shape: f32[3,128], index: 0, kind: input, shape index: {}]
  %s1 = inlined_call_operand.hbm [shape: f32[9,128], index: 1, kind: output, shape index: {}]
  %s2 = sld [smem:[#allocation0]]
  $region18: #{tpu_custom_call.1} parent=0
    _
  %s4 = ssub.s32 1, %s2
  %s5 = scalar_select 0, %s4, %s2
  $region1: #{tpu_custom_call.1} parent=0
    #allocation2 [shape = 'u8[2048]{0}', space=vmem, size = 0x800, scoped, tag = 'input window, operand 0, single buffered']
    #allocation3 [shape = 's32[1]{0}', space=sflag, size = 0x4, scoped, tag = 'scoped memory for tpu_custom_call.1']
    #allocation4 [shape = 's32[1]{0}', space=sflag, size = 0x4, scoped, tag = 'scoped memory for tpu_custom_call.1']
    #allocation5 [shape = 'u8[8192]{0}', space=vmem, size = 0x2000, scoped, tag = 'output window, operand 0, single buffered']
    %6 = vsyncpa [#allocation3], 0
    %7 = vsyncpa [#allocation4], 0
    // Predicated region
    $region2: #{tpu_custom_call.1} parent=1 // pred_check
      _
    $region3: #{tpu_custom_call.1} parent=1 // pred_check_branch
      %9 = sbr.rel (0) target = $region5
    $region4: #{tpu_custom_call.1} parent=1 // pred_region
      %s11 = ssub.s32 64, 64
      %12 = vsyncadd [#allocation3], %s11
      %s14 = sshll.u32 [#allocation2], 4
      %s15 = int_to_ptr.vmem [resolvable:$true] %s14
      %17 = dma.hbm_to_vmem [thread:$0]  %s0, 64, %s15, [#allocation3]
    $region5: #{tpu_custom_call.1} parent=1 // pred_fallthru
      _
    // Predicated region
    $region6: #{tpu_custom_call.1} parent=1 // pred_check
      _
    $region7: #{tpu_custom_call.1} parent=1 // pred_check_branch
      %19 = sbr.rel (0) target = $region9
    $region8: #{tpu_custom_call.1} parent=1 // pred_region
      %20 = dma.done [#allocation3], 64
    $region9: #{tpu_custom_call.1} parent=1 // pred_fallthru
      _
    %v21 = vld [vmem:[#allocation2] sm:$0x1]
    %v22 = vld [vmem:[#allocation2 + $0x1] sm:$0x1]
    %v23 = vld [vmem:[#allocation2 + $0x2] sm:$0x1]
    %v24 = vsub.f32 0.0, %v23
    %v25 = vsub.f32 0.0, %v21
    %v26 = vsub.f32 0.0, %v22
    %v28 = vrot.slane %v24, 7
    %v31 = vrot.slane %v22, 6
    %v34 = vrot.slane %v23, 5
    %v37 = vrot.slane %v25, 3
    %v40 = vrot.slane %v26, 2
    %v43 = vrot.slane %v21, 1
    %vm45 = vcmask 1040384
    %v46 = vsel %vm45, 0.0, %v28
    %vm47 = vcmask 1041408
    %v48 = vsel %vm47, %v46, %v31
    %vm49 = vcmask 1042432
    %v50 = vsel %vm49, %v48, %v34
    %vm51 = vcmask 1043456
    %v52 = vsel %vm51, %v50, 0.0
    %vm53 = vcmask 1044480
    %v54 = vsel %vm53, %v52, %v37
    %vm55 = vcmask 1045504
    %v56 = vsel %vm55, %v54, %v40
    %vm57 = vcmask 1046528
    %v58 = vsel %vm57, %v56, %v43
    %59 = vst [vmem:[#allocation5] sm:$0xff] %v58
    %60 = vst [vmem:[#allocation5 + $0x8] sm:$0x1] 0.0
    // Predicated region
    $region10: #{tpu_custom_call.1} parent=1 // pred_check
      _
    $region11: #{tpu_custom_call.1} parent=1 // pred_check_branch
      %62 = sbr.rel (0) target = $region13
    $region12: #{tpu_custom_call.1} parent=1 // pred_region
      %s64 = ssub.s32 256, 256
      %65 = vsyncadd [#allocation4], %s64
      %s66 = sshll.u32 [#allocation5], 4
      %s67 = int_to_ptr.vmem [resolvable:$true] %s66
      %72 = dma.vmem_to_hbm [thread:$0]  %s67, 256, %s1, [#allocation4], 128, 128, 8
    $region13: #{tpu_custom_call.1} parent=1 // pred_fallthru
      _
    // Predicated region
    $region14: #{tpu_custom_call.1} parent=1 // pred_check
      _
    $region15: #{tpu_custom_call.1} parent=1 // pred_check_branch
      %74 = sbr.rel (0) target = $region17
    $region16: #{tpu_custom_call.1} parent=1 // pred_region
      %75 = dma.done [#allocation4], 256
    $region17: #{tpu_custom_call.1} parent=1 // pred_fallthru
      _
    %76 = vsyncpa [#allocation3], 1
    %77 = vsyncpa [#allocation4], 1

</llo_original>
